<compile_context>
chip_gen: v6e
topology: v6e:2x2x1
jax: 0.10.0
libtpu: 0.0.40
codegen_flags: <defaults>
</compile_context>

<pallas_src>
import functools

import jax
import jax.numpy as jnp
import numpy as np
from jax.experimental import pallas as pl
from jax.experimental.pallas import tpu as pltpu


def _st_attention_kernel(x_ref, nb_ref, wt_ref, ws_ref, o_ref, *, T, L, F):
    # x_ref : (B, T, D)    VMEM (B == F)
    # nb_ref: (B, F, T, D) VMEM
    # wt_ref: (L,)         SMEM scalars (temporal weights)
    # ws_ref: (F,)         SMEM scalars (spatial weights)
    # o_ref : (B, M, D)    VMEM (M == T)
    x = x_ref[...]                                                    # (B, T, D)
    nb = nb_ref[...]                                                  # (B, F, T, D)

    # Spatial scores.  One unweighted T-reduction over the whole (B, F, T, D)
    # block (XLU sublane reduce), then scale the tiny per-f result by the SMEM
    # scalar (weight hoisted out of the reduction).
    s_raw = jnp.sum(x[:, None, :, :] * nb, axis=2, keepdims=True)     # (B, F, 1, D)
    sp = [ws_ref[f] * s_raw[:, f] for f in range(F)]                  # F x (B, 1, D)

    # Concatenated lag blocks.  The softmax over f is elementwise in (a, m, d), so
    # per-lag processing is exact; every op below is a full (B|F, rows, D)
    # lane-dense tile and every store is a (B, rows, 128) slab.
    off = 0
    for lag in range(1, L + 1):
        rows = T - lag
        wt = wt_ref[lag - 1]                                          # scalar, once per lag
        # temporal[f, r] = wt * sum_d x[f, r, d] * x[f, r + lag, d]  (lane reduce)
        t_lag = wt * jnp.sum(x[:, :rows, :] * x[:, lag:, :],
                             axis=2, keepdims=True)                   # (F, rows, 1)

        # combined[a, f, r, d] = t_lag[f, r] + sp[f][a, d]; softmax over f.
        # F == B is tiny by construction, so the f-reduction is F-1 full-tile
        # elementwise ops (no leading-axis vector reduction needed).
        combined = [t_lag[f][None, :, :] + sp[f] for f in range(F)]   # F x (B, rows, D)
        mx = combined[0]
        for f in range(1, F):
            mx = jnp.maximum(mx, combined[f])
        e = [jnp.exp(c - mx) for c in combined]                       # EUP
        denom = e[0]
        for f in range(1, F):
            denom = denom + e[f]
        inv = pl.reciprocal(denom, approx=False)                      # exact, tiny tile

        # out[a, r, d] = (sum_f e[f][a, r, d] * x[f, off + r, d]) * inv[a, r, d]
        numer = e[0] * x[0, off:off + rows, :][None, :, :]
        for f in range(1, F):
            numer = numer + e[f] * x[f, off:off + rows, :][None, :, :]
        o_ref[:, off:off + rows, :] = (numer * inv).astype(o_ref.dtype)
        off += rows


def spatio_temporal_attention(x, spatial_neighbors, temporal_weights, spatial_weights):
    B, T, D = x.shape
    Nb, F, Nt, Nd = spatial_neighbors.shape
    L = int(temporal_weights.shape[0])
    M = sum(T - i for i in range(1, L + 1))
    assert (Nb, Nt, Nd) == (B, T, D)
    assert F == B, "reference forward's broadcasting requires feature_dim == batch"
    assert M == T, "reference forward's broadcasting requires cat-of-lags length == T"

    kernel = functools.partial(_st_attention_kernel, T=T, L=L, F=F)
    return pl.pallas_call(
        kernel,
        out_shape=jax.ShapeDtypeStruct((B, M, D), jnp.float32),
        # Single invocation (no grid): the whole problem is resident in VMEM at the
        # pinned toy shapes, avoiding per-step overhead, pipeline prologue and any
        # dynamic batch indexing.  At real shapes, re-block over batch with a grid.
        in_specs=[
            pl.BlockSpec(memory_space=pltpu.MemorySpace.VMEM),   # x (B, T, D)
            pl.BlockSpec(memory_space=pltpu.MemorySpace.VMEM),   # neighbors (B, F, T, D)
            pl.BlockSpec(memory_space=pltpu.MemorySpace.SMEM),   # temporal weights (L,)
            pl.BlockSpec(memory_space=pltpu.MemorySpace.SMEM),   # spatial weights (F,)
        ],
        out_specs=pl.BlockSpec(memory_space=pltpu.MemorySpace.VMEM),
    )(
        x.astype(jnp.float32),
        spatial_neighbors.astype(jnp.float32),
        temporal_weights.reshape(-1).astype(jnp.float32),        # (L,)
        spatial_weights.reshape(-1).astype(jnp.float32),         # (F,)
    )


def reference_forward(x, nb, wt, ws):
    """Pure-JAX mirror of the PyTorch forward (identical broadcasting)."""
    L = wt.shape[0]
    t_list = []
    for i in range(1, L + 1):
        lagged = x[:, :-i]
        current = x[:, i:]
        att = jnp.sum(wt[i - 1] * lagged * current, axis=2, keepdims=True)
        t_list.append(att)
    temporal = jnp.concatenate(t_list, axis=1)                              # (B, M, 1)
    spatial = jnp.sum(ws * x[:, None, :] * nb, axis=2, keepdims=True)       # (B, F, 1, D)
    combined = temporal + spatial                                           # (B, F, M, D)
    w = jax.nn.softmax(combined, axis=1)
    return jnp.sum(w * x, axis=1)                                           # (B, M, D)


if __name__ == "__main__":
    feature_dim, num_lags = 2, 2
    B, T, D = 2, 3, 128   # F == B and num_lags=2 pin T=3 (see layout note); D lane-dense

    key = jax.random.PRNGKey(0)
    k1, k2, k3, k4 = jax.random.split(key, 4)
    x = jax.random.normal(k1, (B, T, D), jnp.float32)
    spatial_neighbors = jax.random.normal(k2, (B, feature_dim, T, D), jnp.float32)
    temporal_weights = jax.random.normal(k3, (num_lags, 1, 1), jnp.float32)    # torch.randn(num_lags,1,1)
    spatial_weights = jax.random.normal(k4, (feature_dim, 1, 1), jnp.float32)  # torch.randn(feature_dim,1,1)

    out = spatio_temporal_attention(x, spatial_neighbors, temporal_weights, spatial_weights)
    out = jax.block_until_ready(out)

    ref = reference_forward(x, spatial_neighbors, temporal_weights, spatial_weights)
    np.testing.assert_allclose(np.asarray(out), np.asarray(ref), rtol=1e-4, atol=1e-4)
    print("KERNEL_OK")
</pallas_src>

<mosaic_0001>
module attributes {stable_mosaic.version = 11 : i64} {
  func.func @_st_attention_kernel(%arg0: memref<2x3x128xf32, #tpu.memory_space<vmem>>, %arg1: memref<2x2x3x128xf32, #tpu.memory_space<vmem>>, %arg2: memref<2xf32, #tpu.memory_space<smem>>, %arg3: memref<2xf32, #tpu.memory_space<smem>>, %arg4: memref<2x3x128xf32, #tpu.memory_space<vmem>>) attributes {dimension_semantics = [], scalar_prefetch = 0 : i64, scratch_operands = 0 : i64, tpu.core_type = #tpu.core_type<tc>} {
    %c0 = arith.constant 0 : index
    %c0_0 = arith.constant 0 : index
    %c0_1 = arith.constant 0 : index
    %0 = vector.load %arg0[%c0, %c0_0, %c0_1] : memref<2x3x128xf32, #tpu.memory_space<vmem>>, vector<2x3x128xf32>
    %c0_2 = arith.constant 0 : index
    %c0_3 = arith.constant 0 : index
    %c0_4 = arith.constant 0 : index
    %c0_5 = arith.constant 0 : index
    %1 = vector.load %arg1[%c0_2, %c0_3, %c0_4, %c0_5] : memref<2x2x3x128xf32, #tpu.memory_space<vmem>>, vector<2x2x3x128xf32>
    %2 = vector.shape_cast %0 : vector<2x3x128xf32> to vector<2x1x3x128xf32>
    %3 = vector.broadcast %2 : vector<2x1x3x128xf32> to vector<2x2x3x128xf32>
    %4 = arith.mulf %3, %1 : vector<2x2x3x128xf32>
    %cst = arith.constant dense<0.000000e+00> : vector<2x2x128xf32>
    %5 = vector.multi_reduction <add>, %4, %cst [2] : vector<2x2x3x128xf32> to vector<2x2x128xf32>
    %6 = vector.shape_cast %5 : vector<2x2x128xf32> to vector<2x2x1x128xf32>
    %c0_6 = arith.constant 0 : index
    %7 = memref.load %arg3[%c0_6] : memref<2xf32, #tpu.memory_space<smem>>
    %8 = vector.extract_strided_slice %6 {offsets = [0, 0, 0, 0], sizes = [2, 1, 1, 128], strides = [1, 1, 1, 1]} : vector<2x2x1x128xf32> to vector<2x1x1x128xf32>
    %9 = vector.shape_cast %8 : vector<2x1x1x128xf32> to vector<2x1x128xf32>
    %10 = vector.broadcast %7 : f32 to vector<2x1x128xf32>
    %11 = arith.mulf %10, %9 : vector<2x1x128xf32>
    %c1 = arith.constant 1 : index
    %12 = memref.load %arg3[%c1] : memref<2xf32, #tpu.memory_space<smem>>
    %13 = vector.extract_strided_slice %6 {offsets = [0, 1, 0, 0], sizes = [2, 1, 1, 128], strides = [1, 1, 1, 1]} : vector<2x2x1x128xf32> to vector<2x1x1x128xf32>
    %14 = vector.shape_cast %13 : vector<2x1x1x128xf32> to vector<2x1x128xf32>
    %15 = vector.broadcast %12 : f32 to vector<2x1x128xf32>
    %16 = arith.mulf %15, %14 : vector<2x1x128xf32>
    %c0_7 = arith.constant 0 : index
    %17 = memref.load %arg2[%c0_7] : memref<2xf32, #tpu.memory_space<smem>>
    %18 = vector.extract_strided_slice %0 {offsets = [0, 0, 0], sizes = [2, 2, 128], strides = [1, 1, 1]} : vector<2x3x128xf32> to vector<2x2x128xf32>
    %19 = vector.extract_strided_slice %0 {offsets = [0, 1, 0], sizes = [2, 2, 128], strides = [1, 1, 1]} : vector<2x3x128xf32> to vector<2x2x128xf32>
    %20 = arith.mulf %18, %19 : vector<2x2x128xf32>
    %cst_8 = arith.constant dense<0.000000e+00> : vector<2x2xf32>
    %21 = vector.multi_reduction <add>, %20, %cst_8 [2] : vector<2x2x128xf32> to vector<2x2xf32>
    %22 = vector.shape_cast %21 : vector<2x2xf32> to vector<2x2x1xf32>
    %23 = vector.broadcast %17 : f32 to vector<2x2x1xf32>
    %24 = arith.mulf %23, %22 : vector<2x2x1xf32>
    %25 = vector.extract_strided_slice %24 {offsets = [0, 0, 0], sizes = [1, 2, 1], strides = [1, 1, 1]} : vector<2x2x1xf32> to vector<1x2x1xf32>
    %26 = vector.shape_cast %25 : vector<1x2x1xf32> to vector<2x1xf32>
    %27 = vector.shape_cast %26 : vector<2x1xf32> to vector<1x2x1xf32>
    %28 = vector.broadcast %27 : vector<1x2x1xf32> to vector<2x2x128xf32>
    %29 = vector.broadcast %11 : vector<2x1x128xf32> to vector<2x2x128xf32>
    %30 = arith.addf %28, %29 : vector<2x2x128xf32>
    %31 = vector.extract_strided_slice %24 {offsets = [1, 0, 0], sizes = [1, 2, 1], strides = [1, 1, 1]} : vector<2x2x1xf32> to vector<1x2x1xf32>
    %32 = vector.shape_cast %31 : vector<1x2x1xf32> to vector<2x1xf32>
    %33 = vector.shape_cast %32 : vector<2x1xf32> to vector<1x2x1xf32>
    %34 = vector.broadcast %33 : vector<1x2x1xf32> to vector<2x2x128xf32>
    %35 = vector.broadcast %16 : vector<2x1x128xf32> to vector<2x2x128xf32>
    %36 = arith.addf %34, %35 : vector<2x2x128xf32>
    %37 = arith.maximumf %30, %36 : vector<2x2x128xf32>
    %38 = arith.subf %30, %37 : vector<2x2x128xf32>
    %39 = math.exp %38 : vector<2x2x128xf32>
    %40 = arith.subf %36, %37 : vector<2x2x128xf32>
    %41 = math.exp %40 : vector<2x2x128xf32>
    %42 = arith.addf %39, %41 : vector<2x2x128xf32>
    %43 = tpu.reciprocal %42 : vector<2x2x128xf32> -> vector<2x2x128xf32>
    %44 = vector.extract_strided_slice %0 {offsets = [0, 0, 0], sizes = [1, 2, 128], strides = [1, 1, 1]} : vector<2x3x128xf32> to vector<1x2x128xf32>
    %45 = vector.shape_cast %44 : vector<1x2x128xf32> to vector<2x128xf32>
    %46 = vector.shape_cast %45 : vector<2x128xf32> to vector<1x2x128xf32>
    %47 = vector.broadcast %46 : vector<1x2x128xf32> to vector<2x2x128xf32>
    %48 = arith.mulf %39, %47 : vector<2x2x128xf32>
    %49 = vector.extract_strided_slice %0 {offsets = [1, 0, 0], sizes = [1, 2, 128], strides = [1, 1, 1]} : vector<2x3x128xf32> to vector<1x2x128xf32>
    %50 = vector.shape_cast %49 : vector<1x2x128xf32> to vector<2x128xf32>
    %51 = vector.shape_cast %50 : vector<2x128xf32> to vector<1x2x128xf32>
    %52 = vector.broadcast %51 : vector<1x2x128xf32> to vector<2x2x128xf32>
    %53 = arith.mulf %41, %52 : vector<2x2x128xf32>
    %54 = arith.addf %48, %53 : vector<2x2x128xf32>
    %55 = arith.mulf %54, %43 : vector<2x2x128xf32>
    %c0_9 = arith.constant 0 : index
    %c0_10 = arith.constant 0 : index
    %c0_11 = arith.constant 0 : index
    %56 = vector.load %arg4[%c0_9, %c0_10, %c0_11] : memref<2x3x128xf32, #tpu.memory_space<vmem>>, vector<2x2x128xf32>
    tpu.vector_store %arg4[%c0_9, %c0_10, %c0_11], %55 {strides = array<i32>} : memref<2x3x128xf32, #tpu.memory_space<vmem>>, vector<2x2x128xf32>,
    %c1_12 = arith.constant 1 : index
    %57 = memref.load %arg2[%c1_12] : memref<2xf32, #tpu.memory_space<smem>>
    %58 = vector.extract_strided_slice %0 {offsets = [0, 0, 0], sizes = [2, 1, 128], strides = [1, 1, 1]} : vector<2x3x128xf32> to vector<2x1x128xf32>
    %59 = vector.extract_strided_slice %0 {offsets = [0, 2, 0], sizes = [2, 1, 128], strides = [1, 1, 1]} : vector<2x3x128xf32> to vector<2x1x128xf32>
    %60 = arith.mulf %58, %59 : vector<2x1x128xf32>
    %cst_13 = arith.constant dense<0.000000e+00> : vector<2x1xf32>
    %61 = vector.multi_reduction <add>, %60, %cst_13 [2] : vector<2x1x128xf32> to vector<2x1xf32>
    %62 = vector.shape_cast %61 : vector<2x1xf32> to vector<2x1x1xf32>
    %63 = vector.broadcast %57 : f32 to vector<2x1x1xf32>
    %64 = arith.mulf %63, %62 : vector<2x1x1xf32>
    %65 = vector.extract_strided_slice %64 {offsets = [0, 0, 0], sizes = [1, 1, 1], strides = [1, 1, 1]} : vector<2x1x1xf32> to vector<1x1x1xf32>
    %66 = vector.shape_cast %65 : vector<1x1x1xf32> to vector<1x1xf32>
    %67 = vector.shape_cast %66 : vector<1x1xf32> to vector<1x1x1xf32>
    %68 = vector.broadcast %67 : vector<1x1x1xf32> to vector<2x1x128xf32>
    %69 = arith.addf %68, %11 : vector<2x1x128xf32>
    %70 = vector.extract_strided_slice %64 {offsets = [1, 0, 0], sizes = [1, 1, 1], strides = [1, 1, 1]} : vector<2x1x1xf32> to vector<1x1x1xf32>
    %71 = vector.shape_cast %70 : vector<1x1x1xf32> to vector<1x1xf32>
    %72 = vector.shape_cast %71 : vector<1x1xf32> to vector<1x1x1xf32>
    %73 = vector.broadcast %72 : vector<1x1x1xf32> to vector<2x1x128xf32>
    %74 = arith.addf %73, %16 : vector<2x1x128xf32>
    %75 = arith.maximumf %69, %74 : vector<2x1x128xf32>
    %76 = arith.subf %69, %75 : vector<2x1x128xf32>
    %77 = math.exp %76 : vector<2x1x128xf32>
    %78 = arith.subf %74, %75 : vector<2x1x128xf32>
    %79 = math.exp %78 : vector<2x1x128xf32>
    %80 = arith.addf %77, %79 : vector<2x1x128xf32>
    %81 = tpu.reciprocal %80 : vector<2x1x128xf32> -> vector<2x1x128xf32>
    %82 = vector.extract_strided_slice %0 {offsets = [0, 2, 0], sizes = [1, 1, 128], strides = [1, 1, 1]} : vector<2x3x128xf32> to vector<1x1x128xf32>
    %83 = vector.shape_cast %82 : vector<1x1x128xf32> to vector<1x128xf32>
    %84 = vector.shape_cast %83 : vector<1x128xf32> to vector<1x1x128xf32>
    %85 = vector.broadcast %84 : vector<1x1x128xf32> to vector<2x1x128xf32>
    %86 = arith.mulf %77, %85 : vector<2x1x128xf32>
    %87 = vector.extract_strided_slice %0 {offsets = [1, 2, 0], sizes = [1, 1, 128], strides = [1, 1, 1]} : vector<2x3x128xf32> to vector<1x1x128xf32>
    %88 = vector.shape_cast %87 : vector<1x1x128xf32> to vector<1x128xf32>
    %89 = vector.shape_cast %88 : vector<1x128xf32> to vector<1x1x128xf32>
    %90 = vector.broadcast %89 : vector<1x1x128xf32> to vector<2x1x128xf32>
    %91 = arith.mulf %79, %90 : vector<2x1x128xf32>
    %92 = arith.addf %86, %91 : vector<2x1x128xf32>
    %93 = arith.mulf %92, %81 : vector<2x1x128xf32>
    %c0_14 = arith.constant 0 : index
    %c2 = arith.constant 2 : index
    %c0_15 = arith.constant 0 : index
    %94 = vector.load %arg4[%c0_14, %c2, %c0_15] : memref<2x3x128xf32, #tpu.memory_space<vmem>>, vector<2x1x128xf32>
    tpu.vector_store %arg4[%c0_14, %c2, %c0_15], %93 {strides = array<i32>} : memref<2x3x128xf32, #tpu.memory_space<vmem>>, vector<2x1x128xf32>,
    return
  }
}

</mosaic_0001>

<llo_original>
// kernel: tpu_custom_call.1
$region0: #{tpu_custom_call.1}
  #allocation0 [shape = 'u32[]', space=smem, size = 0x4, offset = 0x4, fixed_abs, tag = 'smem constant byte address 0x4 - core index']
  #allocation1 [shape = 'u32[144,128]{1,0:T(1,128)}', space=vmem, size = 0x12000, scoped, tag = 'internal scratch']
  %s0 = inlined_call_operand.vmem [shape: f32[2,3,128], index: 0, kind: input, shape index: {}]
  %s1 = inlined_call_operand.vmem [shape: f32[2,2,3,128], index: 1, kind: input, shape index: {}]
  %s2 = inlined_call_operand.vmem [shape: f32[2], index: 2, kind: input, shape index: {}]
  %s3 = inlined_call_operand.vmem [shape: f32[2], index: 3, kind: input, shape index: {}]
  %s4 = inlined_call_operand.vmem [shape: f32[2,3,128], index: 4, kind: output, shape index: {}]
  %s5 = sld [smem:[#allocation0]]
  $region34: #{tpu_custom_call.1} parent=0
    _
  %s7 = ssub.s32 1, %s5
  %s8 = scalar_select 0, %s7, %s5
  $region1: #{tpu_custom_call.1} parent=0
    #allocation2 [shape = 'u8[512]{0}', space=smem, size = 0x200, scoped, tag = 'input window, operand 2, single buffered']
    #allocation3 [shape = 's32[1]{0}', space=sflag, size = 0x4, scoped, tag = 'scoped memory for tpu_custom_call.1']
    #allocation4 [shape = 'u8[512]{0}', space=smem, size = 0x200, scoped, tag = 'input window, operand 3, single buffered']
    #allocation5 [shape = 's32[1]{0}', space=sflag, size = 0x4, scoped, tag = 'scoped memory for tpu_custom_call.1']
    %9 = vsyncpa [#allocation3], 0
    %10 = vsyncpa [#allocation5], 0
    // Predicated region
    $region2: #{tpu_custom_call.1} parent=1 // pred_check
      _
    $region3: #{tpu_custom_call.1} parent=1 // pred_check_branch
      %12 = sbr.rel (0) target = $region5
    $region4: #{tpu_custom_call.1} parent=1 // pred_region
      _
    $region5: #{tpu_custom_call.1} parent=1 // pred_fallthru
      _
    // Predicated region
    $region6: #{tpu_custom_call.1} parent=1 // pred_check
      _
    $region7: #{tpu_custom_call.1} parent=1 // pred_check_branch
      %14 = sbr.rel (0) target = $region9
    $region8: #{tpu_custom_call.1} parent=1 // pred_region
      _
    $region9: #{tpu_custom_call.1} parent=1 // pred_fallthru
      _
    // Predicated region
    $region10: #{tpu_custom_call.1} parent=1 // pred_check
      _
    $region11: #{tpu_custom_call.1} parent=1 // pred_check_branch
      %16 = sbr.rel (0) target = $region13
    $region12: #{tpu_custom_call.1} parent=1 // pred_region
      %s18 = ssub.s32 16, 16
      %19 = vsyncadd [#allocation3], %s18
      %s21 = sshll.u32 %s2, 4
      %s22 = int_to_ptr.vmem [resolvable:$true] %s21
      %24 = dma.vmem_to_smem %s22, 16, [#allocation2], [#allocation3]
    $region13: #{tpu_custom_call.1} parent=1 // pred_fallthru
      _
    // Predicated region
    $region14: #{tpu_custom_call.1} parent=1 // pred_check
      _
    $region15: #{tpu_custom_call.1} parent=1 // pred_check_branch
      %26 = sbr.rel (0) target = $region17
    $region16: #{tpu_custom_call.1} parent=1 // pred_region
      %s28 = ssub.s32 16, 16
      %29 = vsyncadd [#allocation5], %s28
      %s31 = sshll.u32 %s3, 4
      %s32 = int_to_ptr.vmem [resolvable:$true] %s31
      %34 = dma.vmem_to_smem %s32, 16, [#allocation4], [#allocation5]
    $region17: #{tpu_custom_call.1} parent=1 // pred_fallthru
      _
    // Predicated region
    $region18: #{tpu_custom_call.1} parent=1 // pred_check
      _
    $region19: #{tpu_custom_call.1} parent=1 // pred_check_branch
      %36 = sbr.rel (0) target = $region21
    $region20: #{tpu_custom_call.1} parent=1 // pred_region
      %37 = dma.done [#allocation3], 16
    $region21: #{tpu_custom_call.1} parent=1 // pred_fallthru
      _
    // Predicated region
    $region22: #{tpu_custom_call.1} parent=1 // pred_check
      _
    $region23: #{tpu_custom_call.1} parent=1 // pred_check_branch
      %39 = sbr.rel (0) target = $region25
    $region24: #{tpu_custom_call.1} parent=1 // pred_region
      %40 = dma.done [#allocation5], 16
    $region25: #{tpu_custom_call.1} parent=1 // pred_fallthru
      _
    %41 = sfence
    %v42 = vld [vmem:[%s0] sm:$0x7]
    %v43 = vld [vmem:[%s0 + $0x4] sm:$0x7]
    %v44 = vld [vmem:[%s1] sm:$0x7]
    %v45 = vld [vmem:[%s1 + $0x4] sm:$0x7]
    %v46 = vld [vmem:[%s1 + $0x8] sm:$0x7]
    %v47 = vld [vmem:[%s1 + $0xc] sm:$0x7]
    %v48 = vmul.f32 %v42, %v44
    %v49 = vmul.f32 %v42, %v45
    %v50 = vmul.f32 %v43, %v46
    %v51 = vmul.f32 %v43, %v47
    %vm52 = vcmask 1042432
    %v53 = vsel %vm52, %v48, 0.0
    %v54 = vrot.slane %v53, 4
    %v55 = vadd.f32 %v53, %v54
    %v56 = vrot.slane %v55, 2
    %v57 = vadd.f32 %v55, %v56
    %v58 = vrot.slane %v57, 1
    %v59 = vadd.f32 %v57, %v58
    %v60 = vsel %vm52, %v49, 0.0
    %v61 = vrot.slane %v60, 4
    %v62 = vadd.f32 %v60, %v61
    %v63 = vrot.slane %v62, 2
    %v64 = vadd.f32 %v62, %v63
    %v65 = vrot.slane %v64, 1
    %v66 = vadd.f32 %v64, %v65
    %v67 = vsel %vm52, %v50, 0.0
    %v68 = vrot.slane %v67, 4
    %v69 = vadd.f32 %v67, %v68
    %v70 = vrot.slane %v69, 2
    %v71 = vadd.f32 %v69, %v70
    %v72 = vrot.slane %v71, 1
    %v73 = vadd.f32 %v71, %v72
    %v74 = vsel %vm52, %v51, 0.0
    %v75 = vrot.slane %v74, 4
    %v76 = vadd.f32 %v74, %v75
    %v77 = vrot.slane %v76, 2
    %v78 = vadd.f32 %v76, %v77
    %v79 = vrot.slane %v78, 1
    %v80 = vadd.f32 %v78, %v79
    %s81 = sld [smem:[#allocation4]]
    %v82 = vstv %s81
    %v83 = vmul.f32 %v82, %v59
    %v84 = vmul.f32 %v82, %v73
    %s85 = sld [smem:[#allocation4 + $0x1]]
    %v86 = vstv %s85
    %v87 = vmul.f32 %v86, %v66
    %v88 = vmul.f32 %v86, %v80
    %s89 = sld [smem:[#allocation2]]
    %v92 = vrot.slane %v42, 1
    %v93 = vrot.slane %v43, 1
    %v96 = vmul.f32 %v42, %v92
    %v97 = vmul.f32 %v43, %v93
    %vm98 = vcmask 1041408
    %v99 = vsel %vm98, %v96, 0.0
    %100 = vadd.xlane.f32.xlu0 %v99
    %v101 = vpop.xlane.xlu0 %100
    %v102 = vsel %vm98, %v97, 0.0
    %103 = vadd.xlane.f32.xlu0 %v102
    %v104 = vpop.xlane.xlu0 %103
    %v105 = vstv %s89
    %v106 = vmul.f32 %v105, %v101
    %v107 = vmul.f32 %v105, %v104
    %v108 = vadd.f32 %v106, %v83
    %v109 = vadd.f32 %v106, %v84
    %v110 = vadd.f32 %v107, %v87
    %v111 = vadd.f32 %v107, %v88
    %v112 = vmax.f32 %v108, %v110
    %v113 = vmax.f32 %v109, %v111
    %v114 = vsub.f32 %v108, %v112
    %v115 = vsub.f32 %v109, %v113
    %v116 = vmul.f32 %v114, 1.442695
    %v117 = vpow.pop %v116
    %v118 = vmul.f32 %v115, 1.442695
    %v119 = vpow.pop %v118
    %v120 = vsub.f32 %v110, %v112
    %v121 = vsub.f32 %v111, %v113
    %v122 = vmul.f32 %v120, 1.442695
    %v123 = vpow.pop %v122
    %v124 = vmul.f32 %v121, 1.442695
    %v125 = vpow.pop %v124
    %v126 = vadd.f32 %v117, %v123
    %v127 = vadd.f32 %v119, %v125
    %v128 = vrcp.pop %v126
    %v129 = vrcp.pop %v127
    %v130 = vmul.f32 %v117, %v42
    %v131 = vmul.f32 %v119, %v42
    %v132 = vmul.f32 %v123, %v43
    %v133 = vmul.f32 %v125, %v43
    %v134 = vadd.f32 %v130, %v132
    %v135 = vadd.f32 %v131, %v133
    %v136 = vmul.f32 %v134, %v128
    %v137 = vmul.f32 %v135, %v129
    %138 = vst [vmem:[%s4] sm:$0x3] %v136
    %139 = vst [vmem:[%s4 + $0x4] sm:$0x3] %v137
    %s140 = sld [smem:[#allocation2 + $0x1]]
    %v141 = vrot.slane %v42, 2
    %v142 = vrot.slane %v43, 2
    %v145 = vmul.f32 %v42, %v141
    %v146 = vmul.f32 %v43, %v142
    %vm147 = vcmask 1040384
    %v148 = vsel %vm147, %v145, 0.0
    %149 = vadd.xlane.f32.xlu0 %v148
    %v150 = vpop.xlane.xlu0 %149
    %v151 = vsel %vm147, %v146, 0.0
    %152 = vadd.xlane.f32.xlu0 %v151
    %v153 = vpop.xlane.xlu0 %152
    %v154 = vstv %s140
    %v155 = vmul.f32 %v154, %v150
    %v156 = vmul.f32 %v154, %v153
    %v157 = vadd.f32 %v155, %v83
    %v158 = vadd.f32 %v155, %v84
    %v159 = vadd.f32 %v156, %v87
    %v160 = vadd.f32 %v156, %v88
    %v161 = vmax.f32 %v157, %v159
    %v162 = vmax.f32 %v158, %v160
    %v163 = vsub.f32 %v157, %v161
    %v164 = vsub.f32 %v158, %v162
    %v165 = vmul.f32 %v163, 1.442695
    %v166 = vpow.pop %v165
    %v167 = vmul.f32 %v164, 1.442695
    %v168 = vpow.pop %v167
    %v169 = vsub.f32 %v159, %v161
    %v170 = vsub.f32 %v160, %v162
    %v171 = vmul.f32 %v169, 1.442695
    %v172 = vpow.pop %v171
    %v173 = vmul.f32 %v170, 1.442695
    %v174 = vpow.pop %v173
    %v175 = vadd.f32 %v166, %v172
    %v176 = vadd.f32 %v168, %v174
    %v177 = vrcp.pop %v175
    %v178 = vrcp.pop %v176
    %v179 = vmul.f32 %v166, %v141
    %v180 = vmul.f32 %v168, %v141
    %v181 = vmul.f32 %v172, %v142
    %v182 = vmul.f32 %v174, %v142
    %v183 = vadd.f32 %v179, %v181
    %v184 = vadd.f32 %v180, %v182
    %v185 = vmul.f32 %v183, %v177
    %v186 = vmul.f32 %v184, %v178
    %187 = vst [vmem:[%s4 + $0x2] sm:$0x1] %v185
    %188 = vst [vmem:[%s4 + $0x6] sm:$0x1] %v186
    // Predicated region
    $region26: #{tpu_custom_call.1} parent=1 // pred_check
      _
    $region27: #{tpu_custom_call.1} parent=1 // pred_check_branch
      %190 = sbr.rel (0) target = $region29
    $region28: #{tpu_custom_call.1} parent=1 // pred_region
      _
    $region29: #{tpu_custom_call.1} parent=1 // pred_fallthru
      _
    // Predicated region
    $region30: #{tpu_custom_call.1} parent=1 // pred_check
      _
    $region31: #{tpu_custom_call.1} parent=1 // pred_check_branch
      %192 = sbr.rel (0) target = $region33
    $region32: #{tpu_custom_call.1} parent=1 // pred_region
      _
    $region33: #{tpu_custom_call.1} parent=1 // pred_fallthru
      _
    %193 = vsyncpa [#allocation3], 1
    %194 = vsyncpa [#allocation5], 1

</llo_original>
